<compile_context>
chip_gen: v7x
topology: tpu7x:2x2x1
jax: 0.10.0
libtpu: 0.0.40
codegen_flags: <defaults>
</compile_context>

<pallas_src>
import jax
import jax.numpy as jnp
from jax.experimental import pallas as pl
from jax.experimental.pallas import tpu as pltpu


def _round_up(a, b):
    return -(-a // b) * b


def _vmem_capacity_bytes():
    try:
        info = pltpu.get_tpu_info()
        cap = int(getattr(info, "vmem_capacity_bytes", 0) or 0)
        if cap > 0:
            return cap
    except Exception:
        pass
    return 64 * 1024 * 1024  # conservative default = v7x per-TC VMEM


# ----------------------------- kernel bodies ---------------------------------

def _outconv_vpu_kernel(x_ref, w_ref, b_ref, o_ref):
    """Small-channel path: VPU contraction (no MXU weight-push), f32 acc.

    x_ref: (C_in, T)      lane-dense activation tile
    w_ref: (C_out, C_in)  resident weights
    b_ref: (C_out, 1)     resident bias (broadcast along lanes)
    o_ref: (C_out, T)     lane-dense output tile
    """
    c_in = x_ref.shape[0]
    x = x_ref[...].astype(jnp.float32)
    w = w_ref[...].astype(jnp.float32)
    acc = jnp.zeros(o_ref.shape, jnp.float32)
    for i in range(c_in):  # static unroll: one (C_out, T) FMA per input chan
        acc = acc + w[:, i:i + 1] * x[i:i + 1, :]
    o_ref[...] = (acc + b_ref[...].astype(jnp.float32)).astype(o_ref.dtype)


def _outconv_mxu_kernel(x_ref, w_ref, b_ref, o_ref):
    """Large-channel path: single MXU matmul per spatial tile."""
    acc = jnp.dot(w_ref[...], x_ref[...], preferred_element_type=jnp.float32)
    o_ref[...] = (acc + b_ref[...].astype(jnp.float32)).astype(o_ref.dtype)


def _outconv_mxu_kacc_kernel(x_ref, w_ref, b_ref, o_ref, acc_ref):
    """Very-large-C_in fallback: accumulate over C_in chunks (grid axis 2)."""
    k = pl.program_id(2)

    @pl.when(k == 0)
    def _init():
        acc_ref[...] = jnp.zeros_like(acc_ref)

    acc_ref[...] += jnp.dot(w_ref[...], x_ref[...],
                            preferred_element_type=jnp.float32)

    @pl.when(k == pl.num_programs(2) - 1)
    def _finish():
        o_ref[...] = (acc_ref[...] + b_ref[...].astype(jnp.float32)
                      ).astype(o_ref.dtype)


# --------------------------------- wrapper ------------------------------------

def out_conv(x_nchw, weight, bias):
    """1x1 Conv2d forward (PyTorch nn.Conv2d(in, out, kernel_size=1) semantics).

    x_nchw : (N, C_in, H, W)
    weight : (C_out, C_in, 1, 1)
    bias   : (C_out,)
    returns: (N, C_out, H, W)
    """
    N, C_in, H, W = x_nchw.shape
    C_out = weight.shape[0]
    HW = H * W
    dtype = x_nchw.dtype
    isz = jnp.dtype(dtype).itemsize

    x3 = x_nchw.reshape(N, C_in, HW)       # free view of NCHW
    w_mat = weight.reshape(C_out, C_in)
    b_mat = bias.reshape(C_out, 1)

    vmem_cap = _vmem_capacity_bytes()
    budget = int(0.45 * vmem_cap)          # tile budget (< ~50% of VMEM)
    vmem_ceiling = int(0.75 * vmem_cap)    # ~48 MiB v7x, ~96 MiB v5e/v6e

    # Typical OutConv (final 1x1 in a U-Net): tiny C_out, modest C_in -> VPU.
    use_vpu = (C_out <= 32) and (C_in <= 256)

    # Per-lane VMEM footprint: double-buffered x + out tiles, plus f32 copies /
    # accumulator materialized by the VPU path.
    per_lane = 2 * (C_in + C_out) * isz + 4 * (C_in + C_out)
    raw_t = budget // max(per_lane, 1)

    # If even a 512-wide spatial tile cannot fit double-buffered x, chunk C_in.
    k_chunked = (not use_vpu) and raw_t < 512
    t_cin = C_in
    if k_chunked:
        for cand in (1024, 512, 256, 128):
            if C_in % cand == 0:
                t_cin = cand
                break
        # TODO(synk): if C_in has no multiple-of-128 divisor we keep the
        # unchunked tile (correct, but may exceed the VMEM budget).
        per_lane = 2 * (t_cin + C_out) * isz + 4 * C_out
        raw_t = budget // max(per_lane, 1)

    t_hw_max = max(512, min(32768, (raw_t // 512) * 512))

    if HW <= t_hw_max:
        if N == 1 and HW >= 256:
            # Guarantee >= 2 grid steps so both v7x TensorCores get work.
            t_hw = _round_up(pl.cdiv(HW, 2), 128)
        else:
            t_hw = HW                      # full spatial extent (always legal)
    else:
        t_hw = t_hw_max                    # multiple of 512 (lane/MXU friendly)

    n_hw = pl.cdiv(HW, t_hw)
    tile_bytes = per_lane * t_hw
    param_bytes = 2 * (C_out * C_in + C_out) * isz
    vmem_limit = int(min(vmem_ceiling,
                         max(32 * 1024 * 1024,
                             2 * tile_bytes + param_bytes + (1 << 20))))

    cost = pl.CostEstimate(
        flops=2 * N * HW * C_in * C_out,
        transcendentals=0,
        bytes_accessed=isz * (N * HW * (C_in + C_out) + C_out * C_in + C_out),
    )

    out_shape = jax.ShapeDtypeStruct((N, C_out, HW), dtype)

    if not k_chunked:
        kernel = _outconv_vpu_kernel if use_vpu else _outconv_mxu_kernel
        y3 = pl.pallas_call(
            kernel,
            out_shape=out_shape,
            grid_spec=pltpu.PrefetchScalarGridSpec(
                num_scalar_prefetch=0,
                grid=(N, n_hw),
                in_specs=[
                    # x tile: batch squeezed, channels full, spatial lane-dense.
                    pl.BlockSpec((None, C_in, t_hw), lambda n, j: (n, 0, j)),
                    # weights / bias: resident (constant index map), tiny.
                    pl.BlockSpec((C_out, C_in), lambda n, j: (0, 0)),
                    pl.BlockSpec((C_out, 1), lambda n, j: (0, 0)),
                ],
                out_specs=pl.BlockSpec((None, C_out, t_hw),
                                       lambda n, j: (n, 0, j)),
            ),
            compiler_params=pltpu.CompilerParams(
                dimension_semantics=("parallel", "parallel"),
                vmem_limit_bytes=vmem_limit,
            ),
            cost_estimate=cost,
        )(x3, w_mat, b_mat)
    else:
        n_k = pl.cdiv(C_in, t_cin)
        y3 = pl.pallas_call(
            _outconv_mxu_kacc_kernel,
            out_shape=out_shape,
            grid_spec=pltpu.PrefetchScalarGridSpec(
                num_scalar_prefetch=0,
                grid=(N, n_hw, n_k),       # reduction (C_in chunks) innermost
                in_specs=[
                    pl.BlockSpec((None, t_cin, t_hw),
                                 lambda n, j, k: (n, k, j)),
                    pl.BlockSpec((C_out, t_cin), lambda n, j, k: (0, k)),
                    pl.BlockSpec((C_out, 1), lambda n, j, k: (0, 0)),
                ],
                out_specs=pl.BlockSpec((None, C_out, t_hw),
                                       lambda n, j, k: (n, 0, j)),
                scratch_shapes=[pltpu.VMEM((C_out, t_hw), jnp.float32)],
            ),
            compiler_params=pltpu.CompilerParams(
                dimension_semantics=("parallel", "parallel", "arbitrary"),
                vmem_limit_bytes=vmem_limit,
            ),
            cost_estimate=cost,
        )(x3, w_mat, b_mat)

    # Free reshape back to NCHW.
    return y3.reshape(N, C_out, H, W)


if __name__ == "__main__":
    key = jax.random.PRNGKey(0)
    k_x, k_w, k_b = jax.random.split(key, 3)

    N, C_in, C_out, Hd, Wd = 2, 4, 3, 16, 16

    x = jax.random.normal(k_x, (N, C_in, Hd, Wd), dtype=jnp.float32)
    # Conv2d(in_channels, out_channels, kernel_size=1) parameter shapes.
    weight = jax.random.normal(k_w, (C_out, C_in, 1, 1), dtype=jnp.float32) * 0.1
    bias = jax.random.normal(k_b, (C_out,), dtype=jnp.float32) * 0.1

    run = jax.jit(out_conv)
    y = run(x, weight, bias)
    jax.block_until_ready(y)

    # Reference: plain-JAX 1x1 conv (einsum over channels) + bias.
    y_ref = (jnp.einsum("nihw,oi->nohw", x, weight.reshape(C_out, C_in))
             + bias[None, :, None, None])
    assert y.shape == (N, C_out, Hd, Wd)
    assert jnp.allclose(y, y_ref, atol=1e-5, rtol=1e-5)

    print("KERNEL_OK")
</pallas_src>

<mosaic_0001>
module attributes {stable_mosaic.version = 11 : i64} {
  func.func @_outconv_vpu_kernel(%arg0: i32, %arg1: i32, %arg2: memref<1x4x256xf32, #tpu.memory_space<vmem>>, %arg3: memref<3x4xf32, #tpu.memory_space<vmem>>, %arg4: memref<3x1xf32, #tpu.memory_space<vmem>>, %arg5: memref<1x3x256xf32, #tpu.memory_space<vmem>>) attributes {dimension_semantics = [#tpu.dimension_semantics<parallel>, #tpu.dimension_semantics<parallel>], iteration_bounds = array<i64: 2, 1>, scalar_prefetch = 0 : i64, scratch_operands = 0 : i64, tpu.core_type = #tpu.core_type<tc>, window_params = [{transform_indices = @transform_0, window_bounds = array<i64: 1, 4, 256>}, {pipeline_mode = #tpu.pipeline_mode<synchronous>, transform_indices = @transform_1, window_bounds = array<i64: 3, 4>}, {pipeline_mode = #tpu.pipeline_mode<synchronous>, transform_indices = @transform_2, window_bounds = array<i64: 3, 1>}, {transform_indices = @transform_3, window_bounds = array<i64: 1, 3, 256>}]} {
    %c0 = arith.constant 0 : index
    %c0_0 = arith.constant 0 : index
    %c0_1 = arith.constant 0 : index
    %0 = vector.load %arg2[%c0, %c0_0, %c0_1] : memref<1x4x256xf32, #tpu.memory_space<vmem>>, vector<1x4x256xf32>
    %1 = vector.shape_cast %0 : vector<1x4x256xf32> to vector<4x256xf32>
    %c0_2 = arith.constant 0 : index
    %c0_3 = arith.constant 0 : index
    %2 = vector.load %arg3[%c0_2, %c0_3] : memref<3x4xf32, #tpu.memory_space<vmem>>, vector<3x4xf32>
    %cst = arith.constant 0.000000e+00 : f32
    %3 = vector.broadcast %cst : f32 to vector<3x256xf32>
    %4 = vector.extract_strided_slice %2 {offsets = [0, 0], sizes = [3, 1], strides = [1, 1]} : vector<3x4xf32> to vector<3x1xf32>
    %5 = vector.extract_strided_slice %1 {offsets = [0, 0], sizes = [1, 256], strides = [1, 1]} : vector<4x256xf32> to vector<1x256xf32>
    %6 = vector.broadcast %4 : vector<3x1xf32> to vector<3x256xf32>
    %7 = vector.broadcast %5 : vector<1x256xf32> to vector<3x256xf32>
    %8 = arith.mulf %6, %7 : vector<3x256xf32>
    %9 = arith.addf %3, %8 : vector<3x256xf32>
    %10 = vector.extract_strided_slice %2 {offsets = [0, 1], sizes = [3, 1], strides = [1, 1]} : vector<3x4xf32> to vector<3x1xf32>
    %11 = vector.extract_strided_slice %1 {offsets = [1, 0], sizes = [1, 256], strides = [1, 1]} : vector<4x256xf32> to vector<1x256xf32>
    %12 = vector.broadcast %10 : vector<3x1xf32> to vector<3x256xf32>
    %13 = vector.broadcast %11 : vector<1x256xf32> to vector<3x256xf32>
    %14 = arith.mulf %12, %13 : vector<3x256xf32>
    %15 = arith.addf %9, %14 : vector<3x256xf32>
    %16 = vector.extract_strided_slice %2 {offsets = [0, 2], sizes = [3, 1], strides = [1, 1]} : vector<3x4xf32> to vector<3x1xf32>
    %17 = vector.extract_strided_slice %1 {offsets = [2, 0], sizes = [1, 256], strides = [1, 1]} : vector<4x256xf32> to vector<1x256xf32>
    %18 = vector.broadcast %16 : vector<3x1xf32> to vector<3x256xf32>
    %19 = vector.broadcast %17 : vector<1x256xf32> to vector<3x256xf32>
    %20 = arith.mulf %18, %19 : vector<3x256xf32>
    %21 = arith.addf %15, %20 : vector<3x256xf32>
    %22 = vector.extract_strided_slice %2 {offsets = [0, 3], sizes = [3, 1], strides = [1, 1]} : vector<3x4xf32> to vector<3x1xf32>
    %23 = vector.extract_strided_slice %1 {offsets = [3, 0], sizes = [1, 256], strides = [1, 1]} : vector<4x256xf32> to vector<1x256xf32>
    %24 = vector.broadcast %22 : vector<3x1xf32> to vector<3x256xf32>
    %25 = vector.broadcast %23 : vector<1x256xf32> to vector<3x256xf32>
    %26 = arith.mulf %24, %25 : vector<3x256xf32>
    %27 = arith.addf %21, %26 : vector<3x256xf32>
    %c0_4 = arith.constant 0 : index
    %c0_5 = arith.constant 0 : index
    %28 = vector.load %arg4[%c0_4, %c0_5] : memref<3x1xf32, #tpu.memory_space<vmem>>, vector<3x1xf32>
    %29 = vector.broadcast %28 : vector<3x1xf32> to vector<3x256xf32>
    %30 = arith.addf %27, %29 : vector<3x256xf32>
    %c0_6 = arith.constant 0 : index
    %c0_7 = arith.constant 0 : index
    %c0_8 = arith.constant 0 : index
    %31 = vector.load %arg5[%c0_6, %c0_7, %c0_8] : memref<1x3x256xf32, #tpu.memory_space<vmem>>, vector<1x3x256xf32>
    %32 = vector.shape_cast %31 : vector<1x3x256xf32> to vector<3x256xf32>
    %33 = vector.shape_cast %30 : vector<3x256xf32> to vector<1x3x256xf32>
    tpu.vector_store %arg5[%c0_6, %c0_7, %c0_8], %33 {strides = array<i32>} : memref<1x3x256xf32, #tpu.memory_space<vmem>>, vector<1x3x256xf32>,
    return
  }
  func.func @transform_0(%arg0: i32, %arg1: i32) -> (i32, i32, i32) {
    %c0_i32 = arith.constant 0 : i32
    %c0_i32_0 = arith.constant 0 : i32
    return %arg0, %c0_i32, %arg1 : i32, i32, i32
  }
  func.func @transform_1(%arg0: i32, %arg1: i32) -> (i32, i32) {
    %c0_i32 = arith.constant 0 : i32
    %c0_i32_0 = arith.constant 0 : i32
    %c0_i32_1 = arith.constant 0 : i32
    return %c0_i32, %c0_i32_0 : i32, i32
  }
  func.func @transform_2(%arg0: i32, %arg1: i32) -> (i32, i32) {
    %c0_i32 = arith.constant 0 : i32
    %c0_i32_0 = arith.constant 0 : i32
    %c0_i32_1 = arith.constant 0 : i32
    return %c0_i32, %c0_i32_0 : i32, i32
  }
  func.func @transform_3(%arg0: i32, %arg1: i32) -> (i32, i32, i32) {
    %c0_i32 = arith.constant 0 : i32
    %c0_i32_0 = arith.constant 0 : i32
    return %arg0, %c0_i32, %arg1 : i32, i32, i32
  }
}

</mosaic_0001>

<llo_original>
// kernel: out_conv.1
$region0: #{out_conv.1}
  #allocation0 [shape = 'u32[]', space=smem, size = 0x4, offset = 0x4, fixed_abs, tag = 'smem constant byte address 0x4 - core index']
  #allocation1 [shape = 'u32[144,128]{1,0:T(1,128)}', space=vmem, size = 0x12000, scoped, tag = 'internal scratch']
  %s0 = inlined_call_operand.vmem [shape: f32[2,4,256], index: 0, kind: input, shape index: {}]
  %s1 = inlined_call_operand.vmem [shape: f32[3,4], index: 1, kind: input, shape index: {}]
  %s2 = inlined_call_operand.vmem [shape: f32[3,1], index: 2, kind: input, shape index: {}]
  %s3 = inlined_call_operand.vmem [shape: f32[2,3,256], index: 3, kind: output, shape index: {}]
  %s4 = sld [smem:[#allocation0]]
  $region45: #{out_conv.1} parent=0
    _
  %s6 = ssub.s32 1, %s4
  %s7 = scalar_select 0, %s6, %s4
  loop: start=0, step=1, limit=4
  $region2: #{out_conv.1} parent=0 // loop_pre_header
    _
  $region3: #{out_conv.1} parent=0 // loop_header
    %s9 = sphi 0, %s13
    %p10 = scmp.ge.s32.totalorder %s9, 4
    %s16 = sphi 0, %s28
    %s17 = sphi 0, %s24
    %s18 = sphi 0, %s16
    %s19 = sphi 0, %s17
    %s20 = sphi 0, %s18
    %s21 = sphi 0, %s19
    %s33 = sphi 0, %s35
    %s36 = sphi 0, %s33
    %s37 = sphi 0, %s36
    %s53 = sphi 0, %s37
    %s57 = sphi 0, %s57
    %s59 = sphi 0, %s57
    %s60 = sphi 0, %s59
    %s74 = sphi 0, %s60
    %s78 = sphi 0, %s78
    %s80 = sphi 0, %s78
    %s81 = sphi 0, %s80
    %s95 = sphi 0, %s81
    %s103 = sphi 0, %s105
    %s106 = sphi 0, %s103
    %s107 = sphi 0, %s106
    %s123 = sphi 0, %s107
  $region4: #{out_conv.1} parent=0 // loop_header_branch
    %12 = sbr.rel (%p10) target = $region8
  $region5: #{out_conv.1} parent=0 // loop_body
    %s14 = ssub.s32 %s9, 1
    %s15 = ssub.s32 %s9, 2
    %s22 = sadd.s32 1, %s17
    %p23 = scmp.ge.s32.totalorder %s22, 1
    %s24 = scalar_select %p23, 0, %s22
    %s25 = sadd.s32 1, %s16
    %s26 = scalar_select %p23, %s25, %s16
    %p27 = scmp.ge.s32.totalorder %s26, 2
    %s28 = scalar_select %p27, 0, %s26
    %s29 = ssub.s32 %s16, %s28
    %s30 = ssub.s32 %s17, %s24
    %s31 = sor.u32 %s29, %s30
    %p32 = scmp.eq.s32.totalorder %s31, 0
    %s34 = sadd.s32 %s33, 1
    %s35 = scalar_select %p32, %s33, %s34
    %p38 = pneg %p32
    %p39 = scmp.eq.s32.totalorder %s9, 1
    %p40 = por %p38, %p39
    %p41 = scmp.ne.s32.totalorder %s33, %s36
    %p42 = scmp.eq.s32.totalorder %s9, 0
    %p43 = por %p41, %p42
    %p44 = scmp.ne.s32.totalorder %s33, %s36
    %p45 = scmp.eq.s32.totalorder %s14, 1
    %p46 = por %p44, %p45
    %p47 = scmp.ne.s32.totalorder %s36, %s37
    %p48 = scmp.eq.s32.totalorder %s14, 0
    %p49 = por %p47, %p48
    %p50 = scmp.ne.s32.totalorder %s36, %s37
    %p51 = scmp.eq.s32.totalorder %s15, 1
    %p52 = por %p50, %p51
    %p54 = scmp.ne.s32.totalorder %s37, %s53
    %p55 = scmp.eq.s32.totalorder %s15, 0
    %p56 = por %p54, %p55
    %s58 = sadd.s32 %s57, 1
    %p61 = scmp.eq.s32.totalorder %s9, 1
    %p62 = scmp.ne.s32.totalorder %s57, %s59
    %p63 = scmp.eq.s32.totalorder %s9, 0
    %p64 = por %p62, %p63
    %p65 = scmp.ne.s32.totalorder %s57, %s59
    %p66 = scmp.eq.s32.totalorder %s14, 1
    %p67 = por %p65, %p66
    %p68 = scmp.ne.s32.totalorder %s59, %s60
    %p69 = scmp.eq.s32.totalorder %s14, 0
    %p70 = por %p68, %p69
    %p71 = scmp.ne.s32.totalorder %s59, %s60
    %p72 = scmp.eq.s32.totalorder %s15, 1
    %p73 = por %p71, %p72
    %p75 = scmp.ne.s32.totalorder %s60, %s74
    %p76 = scmp.eq.s32.totalorder %s15, 0
    %p77 = por %p75, %p76
    %s79 = sadd.s32 %s78, 1
    %p82 = scmp.eq.s32.totalorder %s9, 1
    %p83 = scmp.ne.s32.totalorder %s78, %s80
    %p84 = scmp.eq.s32.totalorder %s9, 0
    %p85 = por %p83, %p84
    %p86 = scmp.ne.s32.totalorder %s78, %s80
    %p87 = scmp.eq.s32.totalorder %s14, 1
    %p88 = por %p86, %p87
    %p89 = scmp.ne.s32.totalorder %s80, %s81
    %p90 = scmp.eq.s32.totalorder %s14, 0
    %p91 = por %p89, %p90
    %p92 = scmp.ne.s32.totalorder %s80, %s81
    %p93 = scmp.eq.s32.totalorder %s15, 1
    %p94 = por %p92, %p93
    %p96 = scmp.ne.s32.totalorder %s81, %s95
    %p97 = scmp.eq.s32.totalorder %s15, 0
    %p98 = por %p96, %p97
    %s99 = ssub.s32 %s16, %s28
    %s100 = ssub.s32 %s17, %s24
    %s101 = sor.u32 %s99, %s100
    %p102 = scmp.eq.s32.totalorder %s101, 0
    %s104 = sadd.s32 %s103, 1
    %s105 = scalar_select %p102, %s103, %s104
    %p108 = pneg %p102
    %p109 = scmp.eq.s32.totalorder %s9, 1
    %p110 = por %p108, %p109
    %p111 = scmp.ne.s32.totalorder %s103, %s106
    %p112 = scmp.eq.s32.totalorder %s9, 0
    %p113 = por %p111, %p112
    %p114 = scmp.ne.s32.totalorder %s103, %s106
    %p115 = scmp.eq.s32.totalorder %s14, 1
    %p116 = por %p114, %p115
    %p117 = scmp.ne.s32.totalorder %s106, %s107
    %p118 = scmp.eq.s32.totalorder %s14, 0
    %p119 = por %p117, %p118
    %p120 = scmp.ne.s32.totalorder %s106, %s107
    %p121 = scmp.eq.s32.totalorder %s15, 1
    %p122 = por %p120, %p121
    %p124 = scmp.ne.s32.totalorder %s107, %s123
    %p125 = scmp.eq.s32.totalorder %s15, 0
    %p126 = por %p124, %p125
    %p127 = scmp.le.s32.totalorder 1, %s9
    %p128 = scmp.lt.s32.totalorder %s9, 3
    %p129 = pnand %p127, %p128
    %p130 = pneg %p129
    // Predicated region
    $region9: #{out_conv.1} parent=5 // pred_check
      _
    $region10: #{out_conv.1} parent=5 // pred_check_branch
      %132 = sbr.rel (%p129) target = $region12
    $region11: #{out_conv.1} parent=5 // pred_region
      %s133 = ssub.s32 %s9, 1
      // Predicated region
      $region13: #{out_conv.1} parent=11 // pred_check
        %p134 = pneg %p70
      $region14: #{out_conv.1} parent=11 // pred_check_branch
        %136 = sbr.rel (%p134) target = $region16
      $region15: #{out_conv.1} parent=11 // pred_region
        _
      $region16: #{out_conv.1} parent=11 // pred_fallthru
        _
      // Predicated region
      $region17: #{out_conv.1} parent=11 // pred_check
        %p137 = pneg %p91
      $region18: #{out_conv.1} parent=11 // pred_check_branch
        %139 = sbr.rel (%p137) target = $region20
      $region19: #{out_conv.1} parent=11 // pred_region
        _
      $region20: #{out_conv.1} parent=11 // pred_fallthru
        _
    $region12: #{out_conv.1} parent=5 // pred_fallthru
      _
    %p140 = scmp.lt.s32.totalorder %s9, 2
    // Predicated region
    $region21: #{out_conv.1} parent=5 // pred_check
      %p141 = pneg %p140
    $region22: #{out_conv.1} parent=5 // pred_check_branch
      %143 = sbr.rel (%p141) target = $region24
    $region23: #{out_conv.1} parent=5 // pred_region
      // Predicated region
      $region25: #{out_conv.1} parent=23 // pred_check
        %p144 = pneg %p43
      $region26: #{out_conv.1} parent=23 // pred_check_branch
        %146 = sbr.rel (%p144) target = $region28
      $region27: #{out_conv.1} parent=23 // pred_region
        %s147 = smul.u32 2, %s17
        %p148 = scmp.lt.s32.totalorder %s16, 1
        %s149 = scalar_select %p148, %s16, 1
        %p150 = scmp.lt.s32.totalorder %s147, 1
        %s151 = scalar_select %p150, %s147, 1
        %s152 = smul.addr %s149, 2
        %s153 = sadd.s32 %s151, %s152
        %s154 = smul.addr %s153, 4
        %s155 = scalar_lea.vmem %s0, %s154
        %s156 = smul.u32 2, %s17
      $region28: #{out_conv.1} parent=23 // pred_fallthru
        _
    $region24: #{out_conv.1} parent=5 // pred_fallthru
      _
    %p157 = scmp.le.s32.totalorder 1, %s9
    %p158 = scmp.lt.s32.totalorder %s9, 3
    %p159 = pnand %p157, %p158
    %p160 = pneg %p159
    // Predicated region
    $region29: #{out_conv.1} parent=5 // pred_check
      _
    $region30: #{out_conv.1} parent=5 // pred_check_branch
      %162 = sbr.rel (%p159) target = $region32
    $region31: #{out_conv.1} parent=5 // pred_region
      %s163 = ssub.s32 %s9, 1
      %s164 = smul.u32 2, %s19
      %p165 = scmp.lt.s32.totalorder %s18, 1
      %s166 = scalar_select %p165, %s18, 1
      %p167 = scmp.lt.s32.totalorder %s164, 1
      %s168 = scalar_select %p167, %s164, 1
      %s169 = smul.addr %s166, 2
      %s170 = sadd.s32 %s168, %s169
      %s171 = smul.addr %s170, 4
      %s172 = scalar_lea.vmem %s0, %s171
      %p173 = pneg %p49
      %p174 = pneg %p46
      %p175 = pneg %p70
      %p176 = pneg %p67
      %p177 = pneg %p91
      %p178 = pneg %p88
      %p179 = pneg %p119
      %p180 = pneg %p116
      %s181 = smul.u32 2, %s19
      %p182 = scmp.lt.s32.totalorder %s18, 1
      %s183 = scalar_select %p182, %s18, 1
      %p184 = scmp.lt.s32.totalorder %s181, 1
      %s185 = scalar_select %p184, %s181, 1
      %s186 = smul.addr %s183, 2
      %s187 = sadd.s32 %s185, %s186
      %s188 = smul.addr %s187, 4
      %s189 = scalar_lea.vmem %s3, %s188
      %s190 = smul.u32 2, %s19
      %p191 = scmp.lt.s32.totalorder %s18, 1
      %s192 = scalar_select %p191, %s18, 1
      %p193 = scmp.lt.s32.totalorder %s190, 1
      %s194 = scalar_select %p193, %s190, 1
      %s195 = smul.addr %s192, 2
      %s196 = sadd.s32 %s194, %s195
      %s197 = smul.addr %s196, 4
      %s198 = scalar_lea.vmem %s0, %s197
      %s199 = smul.u32 2, %s19
      %s200 = smul.u32 2, %s19
      %p201 = scmp.lt.s32.totalorder %s18, 1
      %s202 = scalar_select %p201, %s18, 1
      %p203 = scmp.lt.s32.totalorder %s200, 1
      %s204 = scalar_select %p203, %s200, 1
      %s205 = smul.addr %s202, 2
      %s206 = sadd.s32 %s204, %s205
      %s207 = smul.addr %s206, 4
      %s208 = scalar_lea.vmem %s3, %s207
      %s209 = smul.u32 2, %s19
      %v210 = vld [vmem:[%s198] sm:$0xff]
      %v211 = vld [vmem:[%s1] sm:$0x7]
      %213 = vset.pattern.permute.xlu0 0
      %214 = vperm.xlu0 %213, %v211
      %v215 = vpop.permute.xlu0 %214
      %v218 = vlaneseq
      %v219 = vshrl.u32 %v218, 7
      %v220 = vsub.s32 0, %v219
      %v221 = vrot.slane %v210, %v220
      %v222 = vlaneseq
      %v223 = vshrl.u32 %v222, 7
      %v224 = vsub.s32 4, %v223
      %v225 = vrot.slane %v210, %v224
      %v228 = vlaneseq
      %v229 = vshrl.u32 %v228, 7
      %v230 = vsub.s32 0, %v229
      %v231 = vrot.slane %v221, %v230
      %v232 = vlaneseq
      %v233 = vshrl.u32 %v232, 7
      %v234 = vsub.s32 0, %v233
      %v235 = vrot.slane %v225, %v234
      %v236 = vmul.f32 %v215, %v231
      %v237 = vmul.f32 %v215, %v235
      %v238 = vadd.f32 %v236, 0.0
      %v239 = vadd.f32 %v237, 0.0
      %240 = vset.pattern.permute.xlu0 1
      %241 = vperm.xlu0 %240, %v211
      %v242 = vpop.permute.xlu0 %241
      %v244 = vlaneseq
      %v245 = vshrl.u32 %v244, 7
      %v246 = vsub.s32 1, %v245
      %v247 = vrot.slane %v210, %v246
      %v248 = vlaneseq
      %v249 = vshrl.u32 %v248, 7
      %v250 = vsub.s32 5, %v249
      %v251 = vrot.slane %v210, %v250
      %v254 = vlaneseq
      %v255 = vshrl.u32 %v254, 7
      %v256 = vsub.s32 1, %v255
      %v257 = vrot.slane %v247, %v256
      %v258 = vlaneseq
      %v259 = vshrl.u32 %v258, 7
      %v260 = vsub.s32 1, %v259
      %v261 = vrot.slane %v251, %v260
      %v262 = vmul.f32 %v242, %v257
      %v263 = vmul.f32 %v242, %v261
      %v264 = vadd.f32 %v238, %v262
      %v265 = vadd.f32 %v239, %v263
      %266 = vset.pattern.permute.xlu0 2
      %267 = vperm.xlu0 %266, %v211
      %v268 = vpop.permute.xlu0 %267
      %v270 = vlaneseq
      %v271 = vshrl.u32 %v270, 7
      %v272 = vsub.s32 2, %v271
      %v273 = vrot.slane %v210, %v272
      %v274 = vlaneseq
      %v275 = vshrl.u32 %v274, 7
      %v276 = vsub.s32 6, %v275
      %v277 = vrot.slane %v210, %v276
      %v280 = vlaneseq
      %v281 = vshrl.u32 %v280, 7
      %v282 = vsub.s32 2, %v281
      %v283 = vrot.slane %v273, %v282
      %v284 = vlaneseq
      %v285 = vshrl.u32 %v284, 7
      %v286 = vsub.s32 2, %v285
      %v287 = vrot.slane %v277, %v286
      %v288 = vmul.f32 %v268, %v283
      %v289 = vmul.f32 %v268, %v287
      %v290 = vadd.f32 %v264, %v288
      %v291 = vadd.f32 %v265, %v289
      %292 = vset.pattern.permute.xlu0 3
      %293 = vperm.xlu0 %292, %v211
      %v294 = vpop.permute.xlu0 %293
      %v296 = vlaneseq
      %v297 = vshrl.u32 %v296, 7
      %v298 = vsub.s32 3, %v297
      %v299 = vrot.slane %v210, %v298
      %v300 = vlaneseq
      %v301 = vshrl.u32 %v300, 7
      %v302 = vsub.s32 7, %v301
      %v303 = vrot.slane %v210, %v302
      %v306 = vlaneseq
      %v307 = vshrl.u32 %v306, 7
      %v308 = vsub.s32 3, %v307
      %v309 = vrot.slane %v299, %v308
      %v310 = vlaneseq
      %v311 = vshrl.u32 %v310, 7
      %v312 = vsub.s32 3, %v311
      %v313 = vrot.slane %v303, %v312
      %v314 = vmul.f32 %v294, %v309
      %v315 = vmul.f32 %v294, %v313
      %v316 = vadd.f32 %v290, %v314
      %v317 = vadd.f32 %v291, %v315
      %v318 = vld [vmem:[%s2] sm:$0x7]
      %320 = vset.pattern.permute.xlu0 0
      %321 = vperm.xlu0 %320, %v318
      %v322 = vpop.permute.xlu0 %321
      %v324 = vadd.f32 %v316, %v322
      %v325 = vadd.f32 %v317, %v322
      %v328 = vcombine.low %v324, %v325
      %330 = vst [vmem:[%s208] sm:$0x77] %v328
      %s331 = smul.u32 2, %s19
      %p332 = scmp.lt.s32.totalorder %s18, 1
      %s333 = scalar_select %p332, %s18, 1
      %p334 = scmp.lt.s32.totalorder %s331, 1
      %s335 = scalar_select %p334, %s331, 1
      %s336 = smul.addr %s333, 2
      %s337 = sadd.s32 %s335, %s336
      %s338 = smul.addr %s337, 4
      %s339 = scalar_lea.vmem %s3, %s338
      // Predicated region
      $region33: #{out_conv.1} parent=31 // pred_check
        %p340 = pneg %p116
      $region34: #{out_conv.1} parent=31 // pred_check_branch
        %342 = sbr.rel (%p340) target = $region36
      $region35: #{out_conv.1} parent=31 // pred_region
        %s343 = smul.u32 2, %s19
      $region36: #{out_conv.1} parent=31 // pred_fallthru
        _
    $region32: #{out_conv.1} parent=5 // pred_fallthru
      _
    %p344 = scmp.le.s32.totalorder 2, %s9
    // Predicated region
    $region37: #{out_conv.1} parent=5 // pred_check
      %p345 = pneg %p344
    $region38: #{out_conv.1} parent=5 // pred_check_branch
      %347 = sbr.rel (%p345) target = $region40
    $region39: #{out_conv.1} parent=5 // pred_region
      %s348 = ssub.s32 %s9, 2
      // Predicated region
      $region41: #{out_conv.1} parent=39 // pred_check
        %p349 = pneg %p122
      $region42: #{out_conv.1} parent=39 // pred_check_branch
        %351 = sbr.rel (%p349) target = $region44
      $region43: #{out_conv.1} parent=39 // pred_region
        %s352 = smul.u32 2, %s21
        %p353 = scmp.lt.s32.totalorder %s20, 1
        %s354 = scalar_select %p353, %s20, 1
        %p355 = scmp.lt.s32.totalorder %s352, 1
        %s356 = scalar_select %p355, %s352, 1
        %s357 = smul.addr %s354, 2
        %s358 = sadd.s32 %s356, %s357
        %s359 = smul.addr %s358, 4
        %s360 = scalar_lea.vmem %s3, %s359
      $region44: #{out_conv.1} parent=39 // pred_fallthru
        _
    $region40: #{out_conv.1} parent=5 // pred_fallthru
      _
  $region6: #{out_conv.1} parent=0 // loop_footer
    %s13 = sadd.s32 1, %s9
  $region7: #{out_conv.1} parent=0 // loop_footer_branch
    %8 = sbr.rel target = $region3
  $region8: #{out_conv.1} parent=0 // loop_exit
    _

</llo_original>
